<compile_context>
chip_gen: v7x
topology: tpu7x:2x2x1
jax: 0.10.0
libtpu: 0.0.40
codegen_flags: <defaults>
</compile_context>

<pallas_src>
import functools

import jax
import jax.numpy as jnp
from jax import lax
from jax.experimental import pallas as pl
from jax.experimental.pallas import tpu as pltpu


def _round_up(x, m):
    return ((x + m - 1) // m) * m


def _min_sublane(dtype):
    """Minimum sublane multiple for a dtype (second-to-last dim tiling)."""
    return {4: 8, 2: 16, 1: 32}.get(jnp.dtype(dtype).itemsize, 8)


# Contract last dim of x (M, K) with last dim of w (N, K): y = x @ w.T,
# i.e. torch nn.Linear, with no wrapper-side transpose of the weight.
_DN = (((1,), (1,)), ((), ()))


def _fc_small_kernel(x_ref, w_ref, b_ref, o_ref):
    """Whole problem in one VMEM-resident block."""
    acc = lax.dot_general(x_ref[...], w_ref[...], _DN,
                          preferred_element_type=jnp.float32)
    o_ref[...] = (acc + b_ref[...].astype(jnp.float32)).astype(o_ref.dtype)


def _make_tiled_kernel(K, tk, needs_k_mask, direct_out, mxu_dtype):
    """Build a (tm, tn) output-tile kernel reducing over the K grid axis."""

    def kernel(x_ref, w_ref, b_ref, o_ref, *scratch):
        k = pl.program_id(2)

        x = x_ref[...]
        w = w_ref[...]
        if needs_k_mask:
            # Zero the out-of-range K columns of the (partial) last K block so
            # garbage read past the array end contributes nothing.
            rem = K - k * tk
            xc = lax.broadcasted_iota(jnp.int32, x.shape, 1)
            wc = lax.broadcasted_iota(jnp.int32, w.shape, 1)
            x = jnp.where(xc < rem, x, 0)
            w = jnp.where(wc < rem, w, 0)
        if mxu_dtype is not None:
            x = x.astype(mxu_dtype)
            w = w.astype(mxu_dtype)

        part = lax.dot_general(x, w, _DN, preferred_element_type=jnp.float32)

        if direct_out:
            # f32 output: accumulate straight into the resident output block
            # (no scratch, no epilogue copy). Bias fused as the init value.
            @pl.when(k == 0)
            def _():
                o_ref[...] = jnp.broadcast_to(
                    b_ref[...].astype(jnp.float32), o_ref.shape)

            o_ref[...] += part
        else:
            acc_ref = scratch[0]

            @pl.when(k == 0)
            def _():
                acc_ref[...] = jnp.broadcast_to(
                    b_ref[...].astype(jnp.float32), acc_ref.shape)

            acc_ref[...] += part

            @pl.when(k == pl.num_programs(2) - 1)
            def _():
                o_ref[...] = acc_ref[...].astype(o_ref.dtype)

    return kernel


@functools.partial(jax.jit, static_argnames=("tm", "tn", "tk", "use_bf16_mxu"))
def fc_forward(x, w, b, *, tm=512, tn=512, tk=1024, use_bf16_mxu=False):
    """y = x @ w.T + b  (PyTorch nn.Linear semantics).

    x: (..., K), w: (N, K) [torch weight layout], b: (N,). Returns (..., N).
    """
    orig_lead = x.shape[:-1]
    K = x.shape[-1]
    N = w.shape[0]
    M = 1
    for d in orig_lead:
        M *= d

    x2 = x.reshape(M, K)
    b2 = b.reshape(1, N)
    out_dtype = x.dtype
    itemsize = jnp.dtype(x.dtype).itemsize

    # ---- tiny-problem fast path: single VMEM block, no tiling machinery ----
    if (M * K + N * K + M * N) * itemsize <= (2 << 20):
        out = pl.pallas_call(
            _fc_small_kernel,
            out_shape=jax.ShapeDtypeStruct((M, N), out_dtype),
            grid=(1,),
            in_specs=[
                pl.BlockSpec((M, K), lambda i: (0, 0)),
                pl.BlockSpec((N, K), lambda i: (0, 0)),
                pl.BlockSpec((1, N), lambda i: (0, 0)),
            ],
            out_specs=pl.BlockSpec((M, N), lambda i: (0, 0)),
        )(x2, w, b2)
        return out.reshape(orig_lead + (N,))

    # ---- tiled path ----
    sub = _min_sublane(x.dtype)
    tm = min(tm, _round_up(M, sub))
    tn = min(tn, _round_up(N, 128))   # stays a 256-multiple whenever N allows
    tk = min(tk, _round_up(K, 128))

    grid = (pl.cdiv(M, tm), pl.cdiv(N, tn), pl.cdiv(K, tk))
    gm, gn, gk = grid
    needs_k_mask = (K % tk) != 0
    direct_out = jnp.dtype(out_dtype) == jnp.dtype(jnp.float32)
    mxu_dtype = jnp.bfloat16 if use_bf16_mxu else None

    kernel = _make_tiled_kernel(K, tk, needs_k_mask, direct_out, mxu_dtype)
    scratch = [] if direct_out else [pltpu.VMEM((tm, tn), jnp.float32)]

    cost = pl.CostEstimate(
        flops=2 * M * N * K,
        transcendentals=0,
        # x is re-streamed once per N tile, w once per M tile.
        bytes_accessed=(M * K * gn + N * K * gm + N * gm * gn) * itemsize
        + M * N * jnp.dtype(out_dtype).itemsize,
    )

    out = pl.pallas_call(
        kernel,
        out_shape=jax.ShapeDtypeStruct((M, N), out_dtype),
        grid_spec=pltpu.PrefetchScalarGridSpec(
            num_scalar_prefetch=0,
            grid=grid,
            in_specs=[
                pl.BlockSpec((tm, tk), lambda i, j, k: (i, k)),  # x tile
                pl.BlockSpec((tn, tk), lambda i, j, k: (j, k)),  # w tile (N,K)
                pl.BlockSpec((1, tn), lambda i, j, k: (0, j)),   # bias tile
            ],
            out_specs=pl.BlockSpec((tm, tn), lambda i, j, k: (i, j)),
            scratch_shapes=scratch,
        ),
        compiler_params=pltpu.CompilerParams(
            dimension_semantics=("parallel", "parallel", "arbitrary"),
            vmem_limit_bytes=32 * 1024 * 1024,
        ),
        cost_estimate=cost,
    )(x2, w, b2)

    return out.reshape(orig_lead + (N,))


if __name__ == "__main__":
    key = jax.random.PRNGKey(0)
    kx, kw, kb = jax.random.split(key, 3)

    # TinyHAR-style tiny FC: (batch, seq, channel_in) -> (batch, seq, channel_out)
    B, S, C_IN, C_OUT = 2, 16, 32, 64
    x = jax.random.normal(kx, (B, S, C_IN), dtype=jnp.float32)
    w = jax.random.normal(kw, (C_OUT, C_IN), dtype=jnp.float32) * 0.1
    b = jax.random.normal(kb, (C_OUT,), dtype=jnp.float32) * 0.1

    y = jax.block_until_ready(fc_forward(x, w, b))
    y_ref = jnp.einsum("bsk,nk->bsn", x, w) + b
    assert y.shape == (B, S, C_OUT), y.shape
    assert y.dtype == x.dtype
    assert bool(jnp.allclose(y, y_ref, atol=1e-4, rtol=1e-4))

    # Also exercise the tiled (grid) path, including a non-sublane-aligned M.
    M2, K2, N2 = 1170, 256, 384
    k2x, k2w, k2b = jax.random.split(jax.random.PRNGKey(1), 3)
    xl = jax.random.normal(k2x, (M2, K2), dtype=jnp.float32)
    wl = jax.random.normal(k2w, (N2, K2), dtype=jnp.float32) * 0.05
    bl = jax.random.normal(k2b, (N2,), dtype=jnp.float32) * 0.05
    yl = jax.block_until_ready(fc_forward(xl, wl, bl))
    yl_ref = xl @ wl.T + bl
    assert yl.shape == (M2, N2)
    assert bool(jnp.allclose(yl, yl_ref, atol=2e-3, rtol=2e-3))

    print("KERNEL_OK")
</pallas_src>

<mosaic_0001>
module attributes {stable_mosaic.version = 11 : i64} {
  func.func @_fc_small_kernel(%arg0: i32, %arg1: memref<32x32xf32, #tpu.memory_space<vmem>>, %arg2: memref<64x32xf32, #tpu.memory_space<vmem>>, %arg3: memref<1x64xf32, #tpu.memory_space<vmem>>, %arg4: memref<32x64xf32, #tpu.memory_space<vmem>>) attributes {dimension_semantics = [#tpu.dimension_semantics<arbitrary>], iteration_bounds = array<i64: 1>, scalar_prefetch = 0 : i64, scratch_operands = 0 : i64, tpu.core_type = #tpu.core_type<tc>, window_params = [{pipeline_mode = #tpu.pipeline_mode<synchronous>, transform_indices = @transform_0, window_bounds = array<i64: 32, 32>}, {pipeline_mode = #tpu.pipeline_mode<synchronous>, transform_indices = @transform_1, window_bounds = array<i64: 64, 32>}, {pipeline_mode = #tpu.pipeline_mode<synchronous>, transform_indices = @transform_2, window_bounds = array<i64: 1, 64>}, {pipeline_mode = #tpu.pipeline_mode<synchronous>, transform_indices = @transform_3, window_bounds = array<i64: 32, 64>}]} {
    %c0 = arith.constant 0 : index
    %c0_0 = arith.constant 0 : index
    %0 = vector.load %arg1[%c0, %c0_0] : memref<32x32xf32, #tpu.memory_space<vmem>>, vector<32x32xf32>
    %c0_1 = arith.constant 0 : index
    %c0_2 = arith.constant 0 : index
    %1 = vector.load %arg2[%c0_1, %c0_2] : memref<64x32xf32, #tpu.memory_space<vmem>>, vector<64x32xf32>
    %cst = arith.constant dense<0.000000e+00> : vector<32x64xf32>
    %2 = tpu.matmul %0, %1, %cst {dimension_numbers = #tpu.dot_dimension_numbers<[1], [1], [0], [0], [0, 0, 1, 0], [], []>} : vector<32x32xf32>, vector<64x32xf32>, vector<32x64xf32> -> vector<32x64xf32>
    %c0_3 = arith.constant 0 : index
    %c0_4 = arith.constant 0 : index
    %3 = vector.load %arg3[%c0_3, %c0_4] : memref<1x64xf32, #tpu.memory_space<vmem>>, vector<1x64xf32>
    %4 = vector.broadcast %3 : vector<1x64xf32> to vector<32x64xf32>
    %5 = arith.addf %2, %4 : vector<32x64xf32>
    %c0_5 = arith.constant 0 : index
    %c0_6 = arith.constant 0 : index
    %6 = vector.load %arg4[%c0_5, %c0_6] : memref<32x64xf32, #tpu.memory_space<vmem>>, vector<32x64xf32>
    tpu.vector_store %arg4[%c0_5, %c0_6], %5 {strides = array<i32>} : memref<32x64xf32, #tpu.memory_space<vmem>>, vector<32x64xf32>,
    return
  }
  func.func @transform_0(%arg0: i32) -> (i32, i32) {
    %c0_i32 = arith.constant 0 : i32
    %c0_i32_0 = arith.constant 0 : i32
    %c0_i32_1 = arith.constant 0 : i32
    return %c0_i32, %c0_i32_0 : i32, i32
  }
  func.func @transform_1(%arg0: i32) -> (i32, i32) {
    %c0_i32 = arith.constant 0 : i32
    %c0_i32_0 = arith.constant 0 : i32
    %c0_i32_1 = arith.constant 0 : i32
    return %c0_i32, %c0_i32_0 : i32, i32
  }
  func.func @transform_2(%arg0: i32) -> (i32, i32) {
    %c0_i32 = arith.constant 0 : i32
    %c0_i32_0 = arith.constant 0 : i32
    %c0_i32_1 = arith.constant 0 : i32
    return %c0_i32, %c0_i32_0 : i32, i32
  }
  func.func @transform_3(%arg0: i32) -> (i32, i32) {
    %c0_i32 = arith.constant 0 : i32
    %c0_i32_0 = arith.constant 0 : i32
    %c0_i32_1 = arith.constant 0 : i32
    return %c0_i32, %c0_i32_0 : i32, i32
  }
}

</mosaic_0001>

<llo_original>
// kernel: fc_forward.1
$region0: #{fc_forward.1}
  #allocation0 [shape = 'u32[]', space=smem, size = 0x4, offset = 0x4, fixed_abs, tag = 'smem constant byte address 0x4 - core index']
  #allocation1 [shape = 'u32[144,128]{1,0:T(1,128)}', space=vmem, size = 0x12000, scoped, tag = 'internal scratch']
  %s0 = inlined_call_operand.vmem [shape: f32[32,32], index: 0, kind: input, shape index: {}]
  %s1 = inlined_call_operand.vmem [shape: f32[64,32], index: 1, kind: input, shape index: {}]
  %s2 = inlined_call_operand.vmem [shape: f32[1,64], index: 2, kind: input, shape index: {}]
  %s3 = inlined_call_operand.hbm [shape: f32[32,64], index: 3, kind: output, shape index: {}]
  %s4 = sld [smem:[#allocation0]]
  $region22: #{fc_forward.1} parent=0
    _
  %s6 = ssub.s32 1, %s4
  %s7 = scalar_select 0, %s6, %s4
  $region1: #{fc_forward.1} parent=0
    #allocation2 [shape = 'u8[16384]{0}', space=vmem, size = 0x4000, scoped, tag = 'output window, operand 0, single buffered']
    #allocation3 [shape = 's32[1]{0}', space=sflag, size = 0x4, scoped, tag = 'scoped memory for fc_forward.1']
    %8 = vsyncpa [#allocation3], 0
    // Predicated region
    $region2: #{fc_forward.1} parent=1 // pred_check
      _
    $region3: #{fc_forward.1} parent=1 // pred_check_branch
      %10 = sbr.rel (0) target = $region5
    $region4: #{fc_forward.1} parent=1 // pred_region
      _
    $region5: #{fc_forward.1} parent=1 // pred_fallthru
      _
    // Predicated region
    $region6: #{fc_forward.1} parent=1 // pred_check
      _
    $region7: #{fc_forward.1} parent=1 // pred_check_branch
      %12 = sbr.rel (0) target = $region9
    $region8: #{fc_forward.1} parent=1 // pred_region
      _
    $region9: #{fc_forward.1} parent=1 // pred_fallthru
      _
    // Predicated region
    $region10: #{fc_forward.1} parent=1 // pred_check
      _
    $region11: #{fc_forward.1} parent=1 // pred_check_branch
      %14 = sbr.rel (0) target = $region13
    $region12: #{fc_forward.1} parent=1 // pred_region
      _
    $region13: #{fc_forward.1} parent=1 // pred_fallthru
      _
    %v15 = vld [vmem:[%s0] sm:$0xff]
    %v16 = vld [vmem:[%s0 + $0x8] sm:$0xff]
    %v17 = vld [vmem:[%s0 + $0x10] sm:$0xff]
    %v18 = vld [vmem:[%s0 + $0x18] sm:$0xff]
    %v19 = vld [vmem:[%s1] sm:$0xff]
    %v20 = vld [vmem:[%s1 + $0x8] sm:$0xff]
    %v21 = vld [vmem:[%s1 + $0x10] sm:$0xff]
    %v22 = vld [vmem:[%s1 + $0x18] sm:$0xff]
    %v23 = vld [vmem:[%s1 + $0x20] sm:$0xff]
    %v24 = vld [vmem:[%s1 + $0x28] sm:$0xff]
    %v25 = vld [vmem:[%s1 + $0x30] sm:$0xff]
    %v26 = vld [vmem:[%s1 + $0x38] sm:$0xff]
    %v27 = vld [vmem:[%s2] sm:$0x1]
    %v29 = vlaneseq
    %v30 = vshrl.u32 %v29, 7
    %v31 = vsub.s32 0, %v30
    %v32 = vrot.slane %v27, %v31
    %vm34 = vcmask 261120
    %v36 = vsel %vm34, %v15, 0
    %v39 = vsel %vm34, %v16, 0
    %v42 = vsel %vm34, %v17, 0
    %v45 = vsel %vm34, %v18, 0
    %v48 = vsel %vm34, %v19, 0
    %v51 = vsel %vm34, %v20, 0
    %v54 = vsel %vm34, %v21, 0
    %v57 = vsel %vm34, %v22, 0
    %v60 = vsel %vm34, %v23, 0
    %v63 = vsel %vm34, %v24, 0
    %v66 = vsel %vm34, %v25, 0
    %v69 = vsel %vm34, %v26, 0
    %71 = vmatprep.subr.mxu0 0.0
    %72 = vmatpush1.xpose.msra.mxu0 %v48
    %73 = vmatprep.subr.mxu0 0.0
    %74 = vmatpush1.xpose.msra.mxu0 %v51
    %75 = vmatprep.subr.mxu0 0.0
    %76 = vmatpush1.xpose.msra.mxu0 %v54
    %77 = vmatprep.subr.mxu0 0.0
    %78 = vmatpush1.xpose.msra.mxu0 %v57
    %79 = vmatprep.subr.mxu0 0.0
    %80 = vmatpush1.xpose.msra.mxu0 %v60
    %81 = vmatprep.subr.mxu0 0.0
    %82 = vmatpush1.xpose.msra.mxu0 %v63
    %83 = vmatprep.subr.mxu0 0.0
    %84 = vmatpush1.xpose.msra.mxu0 %v66
    %85 = vmatprep.subr.mxu0 0.0
    %86 = vmatpush1.xpose.msra.mxu0 %v69
    %87 = vmatprep.subr.mxu0 0.0
    %88 = vmatpush1.xpose.msra.mxu0 0.0
    %89 = vmatprep.subr.mxu0 0.0
    %90 = vmatpush1.xpose.msra.mxu0 0.0
    %91 = vmatprep.subr.mxu0 0.0
    %92 = vmatpush1.xpose.msra.mxu0 0.0
    %93 = vmatprep.subr.mxu0 0.0
    %94 = vmatpush1.xpose.msra.mxu0 0.0
    %95 = vmatprep.subr.mxu0 0.0
    %96 = vmatpush1.xpose.msra.mxu0 0.0
    %97 = vmatprep.subr.mxu0 0.0
    %98 = vmatpush1.xpose.msra.mxu0 0.0
    %99 = vmatprep.subr.mxu0 0.0
    %100 = vmatpush1.xpose.msra.mxu0 0.0
    %101 = vmatprep.subr.mxu0 0.0
    %102 = vmatpush1.xpose.msra.mxu0 0.0
    %103 = vmatprep.subr.mxu0 0.0
    %104 = vmatpush1.xpose.msra.mxu0 0.0
    %105 = vmatprep.subr.mxu0 0.0
    %106 = vmatpush1.xpose.msra.mxu0 0.0
    %107 = vmatprep.subr.mxu0 0.0
    %108 = vmatpush1.xpose.msra.mxu0 0.0
    %109 = vmatprep.subr.mxu0 0.0
    %110 = vmatpush1.xpose.msra.mxu0 0.0
    %111 = vmatprep.subr.mxu0 0.0
    %112 = vmatpush1.xpose.msra.mxu0 0.0
    %113 = vmatprep.subr.mxu0 0.0
    %114 = vmatpush1.xpose.msra.mxu0 0.0
    %115 = vmatprep.subr.mxu0 0.0
    %116 = vmatpush1.xpose.msra.mxu0 0.0
    %117 = vmatprep.subr.mxu0 0.0
    %118 = vmatpush1.xpose.msra.mxu0 0.0
    %119 = vmatprep.subr.mxu0 0.0
    %120 = vmatpush1.xpose.msra.mxu0 0.0
    %121 = vmatprep.subr.mxu0 0.0
    %122 = vmatpush1.xpose.msra.mxu0 0.0
    %123 = vmatprep.subr.mxu0 0.0
    %124 = vmatpush1.xpose.msra.mxu0 0.0
    %125 = vmatprep.subr.mxu0 0.0
    %126 = vmatpush1.xpose.msra.mxu0 0.0
    %127 = vmatprep.subr.mxu0 0.0
    %128 = vmatpush1.xpose.msra.mxu0 0.0
    %129 = vmatprep.subr.mxu0 0.0
    %130 = vmatpush1.xpose.msra.mxu0 0.0
    %131 = vmatprep.subr.mxu0 0.0
    %132 = vmatpush1.xpose.msra.mxu0 0.0
    %133 = vmatprep.subr.mxu0 0.0
    %134 = vmatpush1.xpose.msra.mxu0 0.0
    %135 = vmatprep.mubr.f32.mxu0 0.0
    %136 = vmatmul.mubr.f32.gmra.mrb[0].mxu0 %v36
    %v137 = vpop.f32.mrb[0].mxu0
    %v138 = vadd.f32 %v32, %v137
    %v139 = vpop.f32.mrb[0].mxu0
    %140 = vmatprep.mubr.f32.mxu0 0.0
    %141 = vmatmul.mubr.f32.gmra.mrb[0].mxu0 %v39
    %v142 = vpop.f32.mrb[0].mxu0
    %v143 = vadd.f32 %v32, %v142
    %v144 = vpop.f32.mrb[0].mxu0
    %145 = vmatprep.mubr.f32.mxu0 0.0
    %146 = vmatmul.mubr.f32.gmra.mrb[0].mxu0 %v42
    %v147 = vpop.f32.mrb[0].mxu0
    %v148 = vadd.f32 %v32, %v147
    %v149 = vpop.f32.mrb[0].mxu0
    %150 = vmatprep.mubr.f32.mxu0 0.0
    %151 = vmatmul.mubr.f32.gmra.mrb[0].mxu0 %v45
    %v152 = vpop.f32.mrb[0].mxu0
    %v153 = vadd.f32 %v32, %v152
    %v154 = vpop.f32.mrb[0].mxu0
    %155 = vdwg.mxu0
    %vm156 = vcmask 523264
    %157 = vst.msk [vmem:[#allocation2] sm:$0xff] %vm156, %v138
    %158 = vst.msk [vmem:[#allocation2 + $0x8] sm:$0xff] %vm156, %v143
    %159 = vst.msk [vmem:[#allocation2 + $0x10] sm:$0xff] %vm156, %v148
    %160 = vst.msk [vmem:[#allocation2 + $0x18] sm:$0xff] %vm156, %v153
    // Predicated region
    $region14: #{fc_forward.1} parent=1 // pred_check
      _
    $region15: #{fc_forward.1} parent=1 // pred_check_branch
      %162 = sbr.rel (0) target = $region17
    $region16: #{fc_forward.1} parent=1 // pred_region
      %s164 = ssub.s32 512, 512
      %165 = vsyncadd [#allocation3], %s164
      %s166 = sshll.u32 [#allocation2], 4
      %s167 = int_to_ptr.vmem [resolvable:$true] %s166
      %172 = dma.vmem_to_hbm [thread:$0]  %s167, 512, %s3, [#allocation3], 128, 128, 8
    $region17: #{fc_forward.1} parent=1 // pred_fallthru
      _
    // Predicated region
    $region18: #{fc_forward.1} parent=1 // pred_check
      _
    $region19: #{fc_forward.1} parent=1 // pred_check_branch
      %174 = sbr.rel (0) target = $region21
    $region20: #{fc_forward.1} parent=1 // pred_region
      %175 = dma.done [#allocation3], 512
    $region21: #{fc_forward.1} parent=1 // pred_fallthru
      _
    %176 = vsyncpa [#allocation3], 1

</llo_original>
